<compile_context>
chip_gen: v7x
topology: tpu7x:2x2x1
jax: 0.10.0
libtpu: 0.0.40
codegen_flags: <defaults>
</compile_context>

<pallas_src>
import functools

import jax
import jax.numpy as jnp
from jax.experimental import pallas as pl
from jax.experimental.pallas import tpu as pltpu


def _se_kernel(x_ref, wr_ref, br_ref, we_ref, be_ref, o_ref, *, inv_hw):
    # x block: (TB, C, HW) in its native dtype; HW may be a ragged lane tail
    # (block dim == full array dim), Mosaic masks the loads/stores/reduction.

    # Squeeze: f32-accumulating sum over the spatial axis (no f32 block copy),
    # divide by the true HW.
    s = jnp.sum(x_ref[...], axis=-1, dtype=jnp.float32) * inv_hw        # (TB, C)

    # 1x1 conv reduce == (TB, C) @ (C, C_red) + bias, then ReLU.
    r = jnp.dot(s, wr_ref[...],
                preferred_element_type=jnp.float32) + br_ref[...]        # (TB, C_red)
    r = jnp.maximum(r, 0.0)

    # 1x1 conv expand == (TB, C_red) @ (C_red, C) + bias, then sigmoid (EUP).
    e = jnp.dot(r, we_ref[...],
                preferred_element_type=jnp.float32) + be_ref[...]        # (TB, C)
    gate = jax.nn.sigmoid(e)                                             # (TB, C) f32

    # Excite: re-read x in its native dtype and multiply by the per-(b,c) gate
    # (cast to x's dtype -> bf16-native multiply on v6e/v7x, plain f32 on f32).
    x = x_ref[...]
    o_ref[...] = (x * gate[:, :, None].astype(x.dtype)).astype(o_ref.dtype)


def _tile_bytes(rows, cols, itemsize):
    """Physical VMEM bytes of a (rows, cols) tile with (sublane, 128) padding."""
    sub = {1: 32, 2: 16, 4: 8}.get(itemsize, 8)
    return (-(-rows // sub) * sub) * (-(-cols // 128) * 128) * itemsize


def _chip_caps():
    """Best-effort (vmem_capacity_bytes, tensorcores_per_chip) with safe fallbacks."""
    vmem_cap = 64 << 20          # conservative default (v7x per-TC VMEM)
    n_tc = 1
    try:
        vmem_cap = int(pltpu.get_tpu_info().vmem_capacity_bytes)
    except Exception:
        pass
    try:
        kind = jax.devices()[0].device_kind.lower()
        if "v7" in kind:         # 2 TensorCores per chip
            n_tc = 2
    except Exception:
        pass
    return vmem_cap, n_tc


def se_block(x_nchw, w_reduce, b_reduce, w_expand, b_expand):
    """x_nchw: (B, C, H, W). Weights follow PyTorch Conv2d(1x1) shapes
    flattened to 2D: w_reduce (C_red, C), w_expand (C, C_red)."""
    B, C, H, W = x_nchw.shape
    C_red = w_reduce.shape[0]
    HW = H * W
    itemsize = jnp.dtype(x_nchw.dtype).itemsize

    # Collapse spatial dims only -- NO pad, NO slice.  The BlockSpec's last two
    # block dims equal the full (C, HW) extents, so the (8,128) rule does not
    # apply and Mosaic masks any ragged lane tail in-kernel.
    x = x_nchw.reshape(B, C, HW)

    # Pre-transpose the tiny weights once (outside the kernel) so the kernel
    # runs plain NN matmuls; gate math stays f32.
    wr_t = w_reduce.astype(jnp.float32).T        # (C, C_red)
    we_t = w_expand.astype(jnp.float32).T        # (C_red, C)
    br = b_reduce.astype(jnp.float32).reshape(1, C_red)
    be = b_expand.astype(jnp.float32).reshape(1, C)

    # ---- hardware-aware budgets -------------------------------------------
    vmem_cap, n_tc = _chip_caps()
    vmem_budget = int(vmem_cap * 0.85)           # leave compiler headroom

    per_batch_bytes = _tile_bytes(C, HW, itemsize)        # physical VMEM per batch row
    weight_bytes = (_tile_bytes(C, C_red, 4) + _tile_bytes(C_red, C, 4)
                    + _tile_bytes(1, C_red, 4) + _tile_bytes(1, C, 4))
    slack_bytes = 2 << 20

    # ---- block sizing: ~6 MiB x blocks, capped so 2x double-buffered in + out
    # blocks plus resident weights fit the VMEM budget.
    target_block_bytes = 6 << 20
    max_block_bytes = max(per_batch_bytes,
                          (vmem_budget - weight_bytes - slack_bytes) // 4)
    blk_target = min(target_block_bytes, max_block_bytes)
    tb = max(1, min(B, blk_target // per_batch_bytes))
    # Only force a grid split on multi-TensorCore chips (>=2 steps per core);
    # single-TC chips (v5e/v6e) keep the largest block that fits.
    min_steps = 2 * n_tc if n_tc >= 2 else 1
    if min_steps > 1 and B // tb < min_steps:
        tb = max(1, B // min_steps)
    while B % tb:
        tb -= 1
    grid = (B // tb,)

    # ---- VMEM request: double-buffered in + out x blocks, weights counted
    # once (constant index_map => resident), plus slack for small temps.
    block_bytes = tb * per_batch_bytes
    vmem_need = 4 * block_bytes + weight_bytes + slack_bytes
    vmem_limit = int(min(max(vmem_need, 32 << 20), vmem_budget))
    # TODO(synk): if even tb=1 overflows the budget (huge C*HW on v7x's 64 MiB
    # VMEM), add a spatial grid axis with a two-phase reduce-then-apply.

    # Advisory cost: bandwidth-bound, exactly one read + one write of x.
    flops = int(4 * B * C * C_red + 3 * B * C * HW)
    transcendentals = int(B * C)
    bytes_accessed = int(2 * B * C * HW * itemsize + weight_bytes)

    kernel = functools.partial(_se_kernel, inv_hw=1.0 / float(HW))

    out = pl.pallas_call(
        kernel,
        out_shape=jax.ShapeDtypeStruct((B, C, HW), x.dtype),
        grid_spec=pltpu.PrefetchScalarGridSpec(
            num_scalar_prefetch=0,
            grid=grid,
            in_specs=[
                pl.BlockSpec((tb, C, HW), lambda b: (b, 0, 0)),     # x (TB batches)
                pl.BlockSpec((C, C_red), lambda b: (0, 0)),         # w_reduce^T
                pl.BlockSpec((1, C_red), lambda b: (0, 0)),         # b_reduce
                pl.BlockSpec((C_red, C), lambda b: (0, 0)),         # w_expand^T
                pl.BlockSpec((1, C), lambda b: (0, 0)),             # b_expand
            ],
            out_specs=pl.BlockSpec((tb, C, HW), lambda b: (b, 0, 0)),
        ),
        compiler_params=pltpu.CompilerParams(
            dimension_semantics=("parallel",),
            vmem_limit_bytes=vmem_limit),
        cost_estimate=pl.CostEstimate(
            flops=flops,
            transcendentals=transcendentals,
            bytes_accessed=bytes_accessed),
    )(x, wr_t, br, we_t, be)

    return out.reshape(B, C, H, W)


def se_block_ref(x, w_reduce, b_reduce, w_expand, b_expand):
    """Pure-JAX reference mirroring the PyTorch forward."""
    s = jnp.mean(x, axis=(2, 3), keepdims=True)                  # (B,C,1,1)
    r = jnp.einsum('oc,bcij->boij', w_reduce, s) + b_reduce[None, :, None, None]
    r = jnp.maximum(r, 0.0)
    e = jnp.einsum('oc,bcij->boij', w_expand, r) + b_expand[None, :, None, None]
    return jax.nn.sigmoid(e) * x


if __name__ == "__main__":
    # Small shapes consistent with the module: batch=2, channels=4 (se_ratio=4
    # -> reduced channels = 1), spatial = 16x16.
    B, C, H, W = 2, 4, 16, 16
    se_ratio = 4
    C_red = C // se_ratio

    key = jax.random.PRNGKey(0)
    kx, kwr, kbr, kwe, kbe = jax.random.split(key, 5)

    x = jax.random.normal(kx, (B, C, H, W), dtype=jnp.float32)
    # Conv2d(C, C_red, 1) weight (C_red, C, 1, 1) -> flattened (C_red, C)
    w_reduce = 0.1 * jax.random.normal(kwr, (C_red, C), dtype=jnp.float32)
    b_reduce = 0.1 * jax.random.normal(kbr, (C_red,), dtype=jnp.float32)
    # Conv2d(C_red, C, 1) weight (C, C_red, 1, 1) -> flattened (C, C_red)
    w_expand = 0.1 * jax.random.normal(kwe, (C, C_red), dtype=jnp.float32)
    b_expand = 0.1 * jax.random.normal(kbe, (C,), dtype=jnp.float32)

    out = se_block(x, w_reduce, b_reduce, w_expand, b_expand)
    out = jax.block_until_ready(out)

    ref = se_block_ref(x, w_reduce, b_reduce, w_expand, b_expand)
    assert out.shape == (B, C, H, W)
    assert jnp.allclose(out, ref, atol=1e-5, rtol=1e-5)

    print("KERNEL_OK")
</pallas_src>

<mosaic_0001>
module attributes {stable_mosaic.version = 11 : i64} {
  func.func @_se_kernel(%arg0: i32, %arg1: memref<2x4x256xf32, #tpu.memory_space<vmem>>, %arg2: memref<4x1xf32, #tpu.memory_space<vmem>>, %arg3: memref<1x1xf32, #tpu.memory_space<vmem>>, %arg4: memref<1x4xf32, #tpu.memory_space<vmem>>, %arg5: memref<1x4xf32, #tpu.memory_space<vmem>>, %arg6: memref<2x4x256xf32, #tpu.memory_space<vmem>>) attributes {dimension_semantics = [#tpu.dimension_semantics<parallel>], iteration_bounds = array<i64: 1>, scalar_prefetch = 0 : i64, scratch_operands = 0 : i64, tpu.core_type = #tpu.core_type<tc>, window_params = [{transform_indices = @transform_0, window_bounds = array<i64: 2, 4, 256>}, {pipeline_mode = #tpu.pipeline_mode<synchronous>, transform_indices = @transform_1, window_bounds = array<i64: 4, 1>}, {pipeline_mode = #tpu.pipeline_mode<synchronous>, transform_indices = @transform_2, window_bounds = array<i64: 1, 1>}, {pipeline_mode = #tpu.pipeline_mode<synchronous>, transform_indices = @transform_3, window_bounds = array<i64: 1, 4>}, {pipeline_mode = #tpu.pipeline_mode<synchronous>, transform_indices = @transform_4, window_bounds = array<i64: 1, 4>}, {transform_indices = @transform_5, window_bounds = array<i64: 2, 4, 256>}]} {
    %c0 = arith.constant 0 : index
    %c0_0 = arith.constant 0 : index
    %c0_1 = arith.constant 0 : index
    %0 = vector.load %arg1[%c0, %c0_0, %c0_1] : memref<2x4x256xf32, #tpu.memory_space<vmem>>, vector<2x4x256xf32>
    %cst = arith.constant dense<0.000000e+00> : vector<2x4xf32>
    %1 = vector.multi_reduction <add>, %0, %cst [2] : vector<2x4x256xf32> to vector<2x4xf32>
    %cst_2 = arith.constant 3.906250e-03 : f32
    %2 = vector.broadcast %cst_2 : f32 to vector<2x4xf32>
    %3 = arith.mulf %1, %2 : vector<2x4xf32>
    %c0_3 = arith.constant 0 : index
    %c0_4 = arith.constant 0 : index
    %4 = vector.load %arg2[%c0_3, %c0_4] : memref<4x1xf32, #tpu.memory_space<vmem>>, vector<4x1xf32>
    %cst_5 = arith.constant dense<0.000000e+00> : vector<2x1xf32>
    %5 = tpu.matmul %3, %4, %cst_5 {dimension_numbers = #tpu.dot_dimension_numbers<[1], [0], [0], [1], [0, 0, 1, 1], [], []>} : vector<2x4xf32>, vector<4x1xf32>, vector<2x1xf32> -> vector<2x1xf32>
    %c0_6 = arith.constant 0 : index
    %c0_7 = arith.constant 0 : index
    %6 = vector.load %arg3[%c0_6, %c0_7] : memref<1x1xf32, #tpu.memory_space<vmem>>, vector<1x1xf32>
    %7 = vector.broadcast %6 : vector<1x1xf32> to vector<2x1xf32>
    %8 = arith.addf %5, %7 : vector<2x1xf32>
    %cst_8 = arith.constant 0.000000e+00 : f32
    %9 = vector.broadcast %cst_8 : f32 to vector<2x1xf32>
    %10 = arith.maximumf %8, %9 : vector<2x1xf32>
    %c0_9 = arith.constant 0 : index
    %c0_10 = arith.constant 0 : index
    %11 = vector.load %arg4[%c0_9, %c0_10] : memref<1x4xf32, #tpu.memory_space<vmem>>, vector<1x4xf32>
    %cst_11 = arith.constant dense<0.000000e+00> : vector<2x4xf32>
    %12 = tpu.matmul %10, %11, %cst_11 {dimension_numbers = #tpu.dot_dimension_numbers<[1], [0], [0], [1], [0, 0, 1, 1], [], []>} : vector<2x1xf32>, vector<1x4xf32>, vector<2x4xf32> -> vector<2x4xf32>
    %c0_12 = arith.constant 0 : index
    %c0_13 = arith.constant 0 : index
    %13 = vector.load %arg5[%c0_12, %c0_13] : memref<1x4xf32, #tpu.memory_space<vmem>>, vector<1x4xf32>
    %14 = vector.broadcast %13 : vector<1x4xf32> to vector<2x4xf32>
    %15 = arith.addf %12, %14 : vector<2x4xf32>
    %16 = arith.negf %15 : vector<2x4xf32>
    %17 = math.exp %16 : vector<2x4xf32>
    %cst_14 = arith.constant 1.000000e+00 : f32
    %18 = vector.broadcast %cst_14 : f32 to vector<2x4xf32>
    %19 = arith.addf %18, %17 : vector<2x4xf32>
    %20 = arith.divf %18, %19 : vector<2x4xf32>
    %c0_15 = arith.constant 0 : index
    %c0_16 = arith.constant 0 : index
    %c0_17 = arith.constant 0 : index
    %21 = vector.load %arg1[%c0_15, %c0_16, %c0_17] : memref<2x4x256xf32, #tpu.memory_space<vmem>>, vector<2x4x256xf32>
    %22 = vector.shape_cast %20 : vector<2x4xf32> to vector<2x4x1xf32>
    %23 = vector.broadcast %22 : vector<2x4x1xf32> to vector<2x4x256xf32>
    %24 = arith.mulf %21, %23 : vector<2x4x256xf32>
    %c0_18 = arith.constant 0 : index
    %c0_19 = arith.constant 0 : index
    %c0_20 = arith.constant 0 : index
    %25 = vector.load %arg6[%c0_18, %c0_19, %c0_20] : memref<2x4x256xf32, #tpu.memory_space<vmem>>, vector<2x4x256xf32>
    tpu.vector_store %arg6[%c0_18, %c0_19, %c0_20], %24 {strides = array<i32>} : memref<2x4x256xf32, #tpu.memory_space<vmem>>, vector<2x4x256xf32>,
    return
  }
  func.func @transform_0(%arg0: i32) -> (i32, i32, i32) {
    %c0_i32 = arith.constant 0 : i32
    %c0_i32_0 = arith.constant 0 : i32
    %c0_i32_1 = arith.constant 0 : i32
    return %arg0, %c0_i32, %c0_i32_0 : i32, i32, i32
  }
  func.func @transform_1(%arg0: i32) -> (i32, i32) {
    %c0_i32 = arith.constant 0 : i32
    %c0_i32_0 = arith.constant 0 : i32
    %c0_i32_1 = arith.constant 0 : i32
    return %c0_i32, %c0_i32_0 : i32, i32
  }
  func.func @transform_2(%arg0: i32) -> (i32, i32) {
    %c0_i32 = arith.constant 0 : i32
    %c0_i32_0 = arith.constant 0 : i32
    %c0_i32_1 = arith.constant 0 : i32
    return %c0_i32, %c0_i32_0 : i32, i32
  }
  func.func @transform_3(%arg0: i32) -> (i32, i32) {
    %c0_i32 = arith.constant 0 : i32
    %c0_i32_0 = arith.constant 0 : i32
    %c0_i32_1 = arith.constant 0 : i32
    return %c0_i32, %c0_i32_0 : i32, i32
  }
  func.func @transform_4(%arg0: i32) -> (i32, i32) {
    %c0_i32 = arith.constant 0 : i32
    %c0_i32_0 = arith.constant 0 : i32
    %c0_i32_1 = arith.constant 0 : i32
    return %c0_i32, %c0_i32_0 : i32, i32
  }
  func.func @transform_5(%arg0: i32) -> (i32, i32, i32) {
    %c0_i32 = arith.constant 0 : i32
    %c0_i32_0 = arith.constant 0 : i32
    %c0_i32_1 = arith.constant 0 : i32
    return %arg0, %c0_i32, %c0_i32_0 : i32, i32, i32
  }
}

</mosaic_0001>

<llo_original>
// kernel: tpu_custom_call.1
$region0: #{tpu_custom_call.1}
  #allocation0 [shape = 'u32[]', space=smem, size = 0x4, offset = 0x4, fixed_abs, tag = 'smem constant byte address 0x4 - core index']
  #allocation1 [shape = 'u32[144,128]{1,0:T(1,128)}', space=vmem, size = 0x12000, scoped, tag = 'internal scratch']
  #allocation2 [shape = 'f32[1,1]{1,0:T(1,128)S(1)}', space=vmem, size = 0x200, scoped, tag = 'scoped memory for tpu_custom_call.1']
  %s0 = inlined_call_operand.hbm [shape: f32[2,4,256], index: 0, kind: input, shape index: {}]
  %s1 = inlined_call_operand.vmem [shape: f32[4,1], index: 1, kind: input, shape index: {}]
  %s2 = inlined_call_operand.<no memory space> [shape: f32[1,1], index: 2, kind: input, shape index: {}]
  %s3 = inlined_call_operand.vmem [shape: f32[1,4], index: 3, kind: input, shape index: {}]
  %s4 = inlined_call_operand.vmem [shape: f32[1,4], index: 4, kind: input, shape index: {}]
  %s5 = inlined_call_operand.hbm [shape: f32[2,4,256], index: 5, kind: output, shape index: {}]
  %s6 = sld [smem:[#allocation0]]
  $region34: #{tpu_custom_call.1} parent=0
    _
  %s8 = ssub.s32 1, %s6
  %s9 = scalar_select 0, %s8, %s6
  %v10 = vstv %s2
  %11 = vst [vmem:[#allocation2] sm:$0x1] %v10
  $region1: #{tpu_custom_call.1} parent=0
    #allocation3 [shape = 'u8[8192]{0}', space=vmem, size = 0x2000, scoped, tag = 'input window, operand 0, single buffered']
    #allocation4 [shape = 's32[1]{0}', space=sflag, size = 0x4, scoped, tag = 'scoped memory for tpu_custom_call.1']
    #allocation5 [shape = 's32[1]{0}', space=sflag, size = 0x4, scoped, tag = 'scoped memory for tpu_custom_call.1']
    #allocation6 [shape = 'u8[8192]{0}', space=vmem, size = 0x2000, scoped, tag = 'output window, operand 0, single buffered']
    %12 = vsyncpa [#allocation4], 0
    %13 = vsyncpa [#allocation5], 0
    // Predicated region
    $region2: #{tpu_custom_call.1} parent=1 // pred_check
      _
    $region3: #{tpu_custom_call.1} parent=1 // pred_check_branch
      %15 = sbr.rel (0) target = $region5
    $region4: #{tpu_custom_call.1} parent=1 // pred_region
      %s17 = ssub.s32 256, 256
      %18 = vsyncadd [#allocation4], %s17
      %s19 = sshll.u32 [#allocation3], 4
      %s20 = int_to_ptr.vmem [resolvable:$true] %s19
      %25 = dma.hbm_to_vmem [thread:$0]  %s0, 256, %s20, [#allocation4], 128, 128, 8
    $region5: #{tpu_custom_call.1} parent=1 // pred_fallthru
      _
    // Predicated region
    $region6: #{tpu_custom_call.1} parent=1 // pred_check
      _
    $region7: #{tpu_custom_call.1} parent=1 // pred_check_branch
      %27 = sbr.rel (0) target = $region9
    $region8: #{tpu_custom_call.1} parent=1 // pred_region
      _
    $region9: #{tpu_custom_call.1} parent=1 // pred_fallthru
      _
    // Predicated region
    $region10: #{tpu_custom_call.1} parent=1 // pred_check
      _
    $region11: #{tpu_custom_call.1} parent=1 // pred_check_branch
      %29 = sbr.rel (0) target = $region13
    $region12: #{tpu_custom_call.1} parent=1 // pred_region
      _
    $region13: #{tpu_custom_call.1} parent=1 // pred_fallthru
      _
    // Predicated region
    $region14: #{tpu_custom_call.1} parent=1 // pred_check
      _
    $region15: #{tpu_custom_call.1} parent=1 // pred_check_branch
      %31 = sbr.rel (0) target = $region17
    $region16: #{tpu_custom_call.1} parent=1 // pred_region
      _
    $region17: #{tpu_custom_call.1} parent=1 // pred_fallthru
      _
    // Predicated region
    $region18: #{tpu_custom_call.1} parent=1 // pred_check
      _
    $region19: #{tpu_custom_call.1} parent=1 // pred_check_branch
      %33 = sbr.rel (0) target = $region21
    $region20: #{tpu_custom_call.1} parent=1 // pred_region
      _
    $region21: #{tpu_custom_call.1} parent=1 // pred_fallthru
      _
    // Predicated region
    $region22: #{tpu_custom_call.1} parent=1 // pred_check
      _
    $region23: #{tpu_custom_call.1} parent=1 // pred_check_branch
      %35 = sbr.rel (0) target = $region25
    $region24: #{tpu_custom_call.1} parent=1 // pred_region
      %36 = dma.done [#allocation4], 256
    $region25: #{tpu_custom_call.1} parent=1 // pred_fallthru
      _
    %v37 = vld [vmem:[#allocation3] sm:$0xff]
    %v38 = vld [vmem:[#allocation3 + $0x8] sm:$0xff]
    %v41 = vcombine.high %v37, %v37
    %v42 = vcombine.high %v38, %v38
    %vm45 = vcmask 1043456
    %v46 = vsel %vm45, %v37, 0.0
    %v47 = vsel %vm45, %v41, 0.0
    %v48 = vadd.f32 %v46, %v47
    %49 = vadd.xlane.f32.xlu0 %v48
    %v50 = vpop.xlane.xlu0 %49
    %v51 = vsel %vm45, %v38, 0.0
    %v52 = vsel %vm45, %v42, 0.0
    %v53 = vadd.f32 %v51, %v52
    %54 = vadd.xlane.f32.xlu0 %v53
    %v55 = vpop.xlane.xlu0 %54
    %v56 = vmul.f32 %v50, 0.00390625
    %v57 = vmul.f32 %v55, 0.00390625
    %v58 = vld [vmem:[%s1] sm:$0xf]
    %v59 = vld [vmem:[#allocation2] sm:$0x1]
    %v61 = vlaneseq
    %v62 = vshrl.u32 %v61, 7
    %v63 = vsub.s32 0, %v62
    %v64 = vrot.slane %v59, %v63
    %v68 = vlaneseq
    %v69 = vand.u32 %v68, 127
    %v70 = vlaneseq
    %v71 = vshrl.u32 %v70, 7
    %v72 = vsub.s32 %v69, %v71
    %v73 = vrot.slane %v56, %v72
    %v74 = vlaneseq
    %v75 = vshrl.u32 %v74, 7
    %v76 = vsub.s32 %v69, %v75
    %v77 = vrot.slane %v57, %v76
    %vm78 = vcmask 1041409
    %v79 = vsel %vm78, %v77, %v73
    %vm80 = vcmask 31744
    %v81 = vsel %vm80, %v79, 0
    %v84 = vsel %vm45, %v58, 0
    %86 = vmatprep.subr.mxu0 0.0
    %87 = vmatpush1.msra.mxu0 %v84
    %88 = vmatprep.subr.mxu0 0.0
    %89 = vmatpush1.msra.mxu0 0.0
    %90 = vmatprep.subr.mxu0 0.0
    %91 = vmatpush1.msra.mxu0 0.0
    %92 = vmatprep.subr.mxu0 0.0
    %93 = vmatpush1.msra.mxu0 0.0
    %94 = vmatprep.subr.mxu0 0.0
    %95 = vmatpush1.msra.mxu0 0.0
    %96 = vmatprep.subr.mxu0 0.0
    %97 = vmatpush1.msra.mxu0 0.0
    %98 = vmatprep.subr.mxu0 0.0
    %99 = vmatpush1.msra.mxu0 0.0
    %100 = vmatprep.subr.mxu0 0.0
    %101 = vmatpush1.msra.mxu0 0.0
    %102 = vmatprep.subr.mxu0 0.0
    %103 = vmatpush1.msra.mxu0 0.0
    %104 = vmatprep.subr.mxu0 0.0
    %105 = vmatpush1.msra.mxu0 0.0
    %106 = vmatprep.subr.mxu0 0.0
    %107 = vmatpush1.msra.mxu0 0.0
    %108 = vmatprep.subr.mxu0 0.0
    %109 = vmatpush1.msra.mxu0 0.0
    %110 = vmatprep.subr.mxu0 0.0
    %111 = vmatpush1.msra.mxu0 0.0
    %112 = vmatprep.subr.mxu0 0.0
    %113 = vmatpush1.msra.mxu0 0.0
    %114 = vmatprep.subr.mxu0 0.0
    %115 = vmatpush1.msra.mxu0 0.0
    %116 = vmatprep.subr.mxu0 0.0
    %117 = vmatpush1.msra.mxu0 0.0
    %118 = vmatprep.subr.mxu0 0.0
    %119 = vmatpush1.msra.mxu0 0.0
    %120 = vmatprep.subr.mxu0 0.0
    %121 = vmatpush1.msra.mxu0 0.0
    %122 = vmatprep.subr.mxu0 0.0
    %123 = vmatpush1.msra.mxu0 0.0
    %124 = vmatprep.subr.mxu0 0.0
    %125 = vmatpush1.msra.mxu0 0.0
    %126 = vmatprep.subr.mxu0 0.0
    %127 = vmatpush1.msra.mxu0 0.0
    %128 = vmatprep.subr.mxu0 0.0
    %129 = vmatpush1.msra.mxu0 0.0
    %130 = vmatprep.subr.mxu0 0.0
    %131 = vmatpush1.msra.mxu0 0.0
    %132 = vmatprep.subr.mxu0 0.0
    %133 = vmatpush1.msra.mxu0 0.0
    %134 = vmatprep.subr.mxu0 0.0
    %135 = vmatpush1.msra.mxu0 0.0
    %136 = vmatprep.subr.mxu0 0.0
    %137 = vmatpush1.msra.mxu0 0.0
    %138 = vmatprep.subr.mxu0 0.0
    %139 = vmatpush1.msra.mxu0 0.0
    %140 = vmatprep.subr.mxu0 0.0
    %141 = vmatpush1.msra.mxu0 0.0
    %142 = vmatprep.subr.mxu0 0.0
    %143 = vmatpush1.msra.mxu0 0.0
    %144 = vmatprep.subr.mxu0 0.0
    %145 = vmatpush1.msra.mxu0 0.0
    %146 = vmatprep.subr.mxu0 0.0
    %147 = vmatpush1.msra.mxu0 0.0
    %148 = vmatprep.subr.mxu0 0.0
    %149 = vmatpush1.msra.mxu0 0.0
    %150 = vmatprep.mubr.f32.mxu0 0.0
    %151 = vmatmul.mubr.f32.gmra.mrb[0].mxu0 %v81
    %v152 = vpop.f32.mrb[0].mxu0
    %v153 = vadd.f32 %v64, %v152
    %v154 = vpop.f32.mrb[0].mxu0
    %155 = vdwg.mxu0
    %v156 = vmax.f32 %v153, 0.0
    %v157 = vld [vmem:[%s3] sm:$0x1]
    %v158 = vld [vmem:[%s4] sm:$0x1]
    %v160 = vlaneseq
    %v161 = vshrl.u32 %v160, 7
    %v162 = vsub.s32 0, %v161
    %v163 = vrot.slane %v158, %v162
    %vm165 = vcmask 7168
    %v167 = vsel %vm165, %v156, 0
    %vm169 = vcmask 1040384
    %v171 = vsel %vm169, %v157, 0
    %173 = vmatprep.subr.mxu0 0.0
    %174 = vmatpush1.msra.mxu0 %v171
    %175 = vmatprep.subr.mxu0 0.0
    %176 = vmatpush1.msra.mxu0 0.0
    %177 = vmatprep.subr.mxu0 0.0
    %178 = vmatpush1.msra.mxu0 0.0
    %179 = vmatprep.subr.mxu0 0.0
    %180 = vmatpush1.msra.mxu0 0.0
    %181 = vmatprep.subr.mxu0 0.0
    %182 = vmatpush1.msra.mxu0 0.0
    %183 = vmatprep.subr.mxu0 0.0
    %184 = vmatpush1.msra.mxu0 0.0
    %185 = vmatprep.subr.mxu0 0.0
    %186 = vmatpush1.msra.mxu0 0.0
    %187 = vmatprep.subr.mxu0 0.0
    %188 = vmatpush1.msra.mxu0 0.0
    %189 = vmatprep.subr.mxu0 0.0
    %190 = vmatpush1.msra.mxu0 0.0
    %191 = vmatprep.subr.mxu0 0.0
    %192 = vmatpush1.msra.mxu0 0.0
    %193 = vmatprep.subr.mxu0 0.0
    %194 = vmatpush1.msra.mxu0 0.0
    %195 = vmatprep.subr.mxu0 0.0
    %196 = vmatpush1.msra.mxu0 0.0
    %197 = vmatprep.subr.mxu0 0.0
    %198 = vmatpush1.msra.mxu0 0.0
    %199 = vmatprep.subr.mxu0 0.0
    %200 = vmatpush1.msra.mxu0 0.0
    %201 = vmatprep.subr.mxu0 0.0
    %202 = vmatpush1.msra.mxu0 0.0
    %203 = vmatprep.subr.mxu0 0.0
    %204 = vmatpush1.msra.mxu0 0.0
    %205 = vmatprep.subr.mxu0 0.0
    %206 = vmatpush1.msra.mxu0 0.0
    %207 = vmatprep.subr.mxu0 0.0
    %208 = vmatpush1.msra.mxu0 0.0
    %209 = vmatprep.subr.mxu0 0.0
    %210 = vmatpush1.msra.mxu0 0.0
    %211 = vmatprep.subr.mxu0 0.0
    %212 = vmatpush1.msra.mxu0 0.0
    %213 = vmatprep.subr.mxu0 0.0
    %214 = vmatpush1.msra.mxu0 0.0
    %215 = vmatprep.subr.mxu0 0.0
    %216 = vmatpush1.msra.mxu0 0.0
    %217 = vmatprep.subr.mxu0 0.0
    %218 = vmatpush1.msra.mxu0 0.0
    %219 = vmatprep.subr.mxu0 0.0
    %220 = vmatpush1.msra.mxu0 0.0
    %221 = vmatprep.subr.mxu0 0.0
    %222 = vmatpush1.msra.mxu0 0.0
    %223 = vmatprep.subr.mxu0 0.0
    %224 = vmatpush1.msra.mxu0 0.0
    %225 = vmatprep.subr.mxu0 0.0
    %226 = vmatpush1.msra.mxu0 0.0
    %227 = vmatprep.subr.mxu0 0.0
    %228 = vmatpush1.msra.mxu0 0.0
    %229 = vmatprep.subr.mxu0 0.0
    %230 = vmatpush1.msra.mxu0 0.0
    %231 = vmatprep.subr.mxu0 0.0
    %232 = vmatpush1.msra.mxu0 0.0
    %233 = vmatprep.subr.mxu0 0.0
    %234 = vmatpush1.msra.mxu0 0.0
    %235 = vmatprep.subr.mxu0 0.0
    %236 = vmatpush1.msra.mxu0 0.0
    %237 = vmatprep.mubr.f32.mxu0 0.0
    %238 = vmatmul.mubr.f32.gmra.mrb[0].mxu0 %v167
    %v239 = vpop.f32.mrb[0].mxu0
    %v240 = vadd.f32 %v163, %v239
    %v241 = vpop.f32.mrb[0].mxu0
    %242 = vdwg.mxu0
    %v243 = vxor.u32 %v240, 2147483648
    %v244 = vmul.f32 %v243, 1.442695
    %v245 = vpow.pop %v244
    %v246 = vadd.f32 %v245, 1.0
    %v247 = vrcp.pop %v246
    %v248 = vmul.f32 1.0, %v247
    %v249 = vlaneseq
    %v250 = vshrl.u32 %v249, 7
    %v251 = vsub.s32 0, %v250
    %v252 = vrot.slane %v248, %v251
    %254 = vbcast.lane.b32.xlu0 %v252, 256
    %v255 = vpop.permute.xlu0 %254
    %v256 = vlaneseq
    %v257 = vshrl.u32 %v256, 7
    %v258 = vsub.s32 1, %v257
    %v259 = vrot.slane %v248, %v258
    %261 = vbcast.lane.b32.xlu0 %v259, 256
    %v262 = vpop.permute.xlu0 %261
    %v266 = vunpack.c.l.s4 839922192
    %v267 = vunpack.c.0.s8 %v266
    %v268 = vlaneseq
    %v269 = vshrl.u32 %v268, 7
    %v270 = vsub.s32 %v267, %v269
    %v271 = vrot.slane %v255, %v270
    %v273 = vunpack.c.l.s4 839922192
    %v274 = vunpack.c.0.s8 %v273
    %v275 = vlaneseq
    %v276 = vshrl.u32 %v275, 7
    %v277 = vsub.s32 %v274, %v276
    %v278 = vrot.slane %v262, %v277
    %v281 = vmul.f32 %v37, %v271
    %v282 = vmul.f32 %v38, %v278
    %283 = vst [vmem:[#allocation6] sm:$0xff] %v281
    %284 = vst [vmem:[#allocation6 + $0x8] sm:$0xff] %v282
    // Predicated region
    $region26: #{tpu_custom_call.1} parent=1 // pred_check
      _
    $region27: #{tpu_custom_call.1} parent=1 // pred_check_branch
      %286 = sbr.rel (0) target = $region29
    $region28: #{tpu_custom_call.1} parent=1 // pred_region
      %s288 = ssub.s32 256, 256
      %289 = vsyncadd [#allocation5], %s288
      %s290 = sshll.u32 [#allocation6], 4
      %s291 = int_to_ptr.vmem [resolvable:$true] %s290
      %296 = dma.vmem_to_hbm [thread:$0]  %s291, 256, %s5, [#allocation5], 128, 128, 8
    $region29: #{tpu_custom_call.1} parent=1 // pred_fallthru
      _
    // Predicated region
    $region30: #{tpu_custom_call.1} parent=1 // pred_check
      _
    $region31: #{tpu_custom_call.1} parent=1 // pred_check_branch
      %298 = sbr.rel (0) target = $region33
    $region32: #{tpu_custom_call.1} parent=1 // pred_region
      %299 = dma.done [#allocation5], 256
    $region33: #{tpu_custom_call.1} parent=1 // pred_fallthru
      _
    %300 = vsyncpa [#allocation4], 1
    %301 = vsyncpa [#allocation5], 1

</llo_original>
